<compile_context>
chip_gen: v5e
topology: v5e:2x2
jax: 0.10.0
libtpu: 0.0.40
codegen_flags: <defaults>
</compile_context>

<pallas_src>
from functools import partial

import jax
import jax.numpy as jnp
from jax import lax
from jax.experimental import pallas as pl
from jax.experimental.pallas import tpu as pltpu


# Row-tile cap for the M-tiled projection kernels.  512 fits v7x's 64 MiB VMEM
# with double buffering; on v5e/v6e (128 MiB) it could be raised to 1024 for a
# ~1% roofline gain.  Small problems use the full extent (single block).
_TM_MAX = 512


def _row_tile(m):
    return m if m <= _TM_MAX else _TM_MAX   # _TM_MAX is a multiple of 8


# ------------------------------ projection kernels ----------------------------


def _q_proj_kernel(x_ref, w_ref, o_ref):
    # f32 input read once from HBM, cast to bf16 in-kernel; f32 MXU accumulate.
    x = x_ref[...].astype(jnp.bfloat16)
    o_ref[...] = jnp.dot(x, w_ref[...],
                         preferred_element_type=jnp.float32).astype(o_ref.dtype)


def q_proj_pallas(x2d, w_bf16):
    """q = x2d @ w (no bias).  x2d: (M, K) f32, w: (K, N) bf16 -> (M, N) bf16."""
    M, K = x2d.shape
    N = w_bf16.shape[1]
    tm = _row_tile(M)
    return pl.pallas_call(
        _q_proj_kernel,
        out_shape=jax.ShapeDtypeStruct((M, N), jnp.bfloat16),
        grid=(pl.cdiv(M, tm),),
        in_specs=[pl.BlockSpec((tm, K), lambda i: (i, 0)),
                  pl.BlockSpec((K, N), lambda i: (0, 0))],
        out_specs=pl.BlockSpec((tm, N), lambda i: (i, 0)),
        compiler_params=pltpu.CompilerParams(dimension_semantics=("parallel",)),
        cost_estimate=pl.CostEstimate(
            flops=2 * M * K * N, transcendentals=0,
            bytes_accessed=4 * M * K + 2 * K * N + 2 * M * N),
    )(x2d, w_bf16)


def _qkv_fused_kernel(x_ref, w_ref, q_ref, kv_ref):
    # One wide matmul over the concatenated (C, 3C) weight; two stores.
    x = x_ref[...].astype(jnp.bfloat16)
    y = jnp.dot(x, w_ref[...], preferred_element_type=jnp.float32)   # (tm, 3C)
    C = q_ref.shape[-1]
    q_ref[...] = y[:, :C].astype(q_ref.dtype)
    kv_ref[...] = y[:, C:].astype(kv_ref.dtype)


def qkv_fused_pallas(x2d, qkv_w_bf16):
    """Fused q + kv projection (sr_ratio == 1 path, qkv_bias=False).
    x2d: (M, C) f32, qkv_w: (C, 3C) bf16 (softmax scale folded into q columns).
    Returns q: (M, C) bf16, kv: (M, 2C) bf16."""
    M, C = x2d.shape
    threeC = qkv_w_bf16.shape[1]
    tm = _row_tile(M)
    return pl.pallas_call(
        _qkv_fused_kernel,
        out_shape=(jax.ShapeDtypeStruct((M, C), jnp.bfloat16),
                   jax.ShapeDtypeStruct((M, threeC - C), jnp.bfloat16)),
        grid=(pl.cdiv(M, tm),),
        in_specs=[pl.BlockSpec((tm, C), lambda i: (i, 0)),
                  pl.BlockSpec((C, threeC), lambda i: (0, 0))],
        out_specs=(pl.BlockSpec((tm, C), lambda i: (i, 0)),
                   pl.BlockSpec((tm, threeC - C), lambda i: (i, 0))),
        compiler_params=pltpu.CompilerParams(dimension_semantics=("parallel",)),
        cost_estimate=pl.CostEstimate(
            flops=2 * M * C * threeC, transcendentals=0,
            bytes_accessed=4 * M * C + 2 * C * threeC + 2 * M * threeC),
    )(x2d, qkv_w_bf16)


def _sr_ln_kv_kernel(p_ref, srw_ref, srb_ref, g_ref, bln_ref, kvw_ref, o_ref,
                     *, eps):
    # sr conv (as patch matmul) + bias -> LayerNorm (f32 stats) -> kv matmul.
    p = p_ref[...].astype(jnp.bfloat16)
    red = jnp.dot(p, srw_ref[...], preferred_element_type=jnp.float32) + srb_ref[...]
    mu = jnp.mean(red, axis=-1, keepdims=True)
    xc = red - mu
    var = jnp.mean(xc * xc, axis=-1, keepdims=True)
    y = xc * lax.rsqrt(var + eps) * g_ref[...] + bln_ref[...]
    o_ref[...] = jnp.dot(y.astype(jnp.bfloat16), kvw_ref[...],
                         preferred_element_type=jnp.float32).astype(o_ref.dtype)


def sr_ln_kv_pallas(patches2d, sr_w_bf16, sr_b, norm_w, norm_b, kv_w_bf16,
                    eps=1e-5):
    """Fused spatial-reduction conv + LayerNorm + kv projection (sr_ratio > 1).
    patches2d: (M, C*p*p) f32 -> kv: (M, 2C) bf16."""
    M, K = patches2d.shape
    C = sr_w_bf16.shape[1]
    N = kv_w_bf16.shape[1]
    tm = _row_tile(M)
    return pl.pallas_call(
        partial(_sr_ln_kv_kernel, eps=eps),
        out_shape=jax.ShapeDtypeStruct((M, N), jnp.bfloat16),
        grid=(pl.cdiv(M, tm),),
        in_specs=[pl.BlockSpec((tm, K), lambda i: (i, 0)),
                  pl.BlockSpec((K, C), lambda i: (0, 0)),
                  pl.BlockSpec((1, C), lambda i: (0, 0)),
                  pl.BlockSpec((1, C), lambda i: (0, 0)),
                  pl.BlockSpec((1, C), lambda i: (0, 0)),
                  pl.BlockSpec((C, N), lambda i: (0, 0))],
        out_specs=pl.BlockSpec((tm, N), lambda i: (i, 0)),
        compiler_params=pltpu.CompilerParams(dimension_semantics=("parallel",)),
        cost_estimate=pl.CostEstimate(
            flops=2 * M * K * C + 2 * M * C * N + 8 * M * C,
            transcendentals=M,
            bytes_accessed=4 * M * K + 2 * K * C + 2 * C * N + 2 * M * N + 16 * C),
    )(patches2d, sr_w_bf16, sr_b, norm_w, norm_b, kv_w_bf16)


# -------------------------- fused attention + projection ----------------------


def _attn_proj_kernel(q_ref, kv_ref, pw_ref, pb_ref, o_ref, hs_ref, *,
                      num_heads, nz, z_kv, approx_recip):
    """One batch element per grid step.  Heads stay packed along the channel
    (lane) dim; k/v are column halves of the kv block.  z queries (rows < nz)
    are masked to the first z_kv keys, x queries see all keys (matches the
    module's split attention exactly).  The output projection is fused."""
    q = q_ref[0]        # (N, C)   bf16 -- softmax scale folded into q_w
    kv = kv_ref[0]      # (Nk, 2C) bf16 -- cols [0:C] = k, [C:2C] = v
    N, C = q.shape
    Nk = kv.shape[0]
    dh = C // num_heads

    # additive mask, built once (shared across heads)
    if nz > 0 and z_kv < Nk:
        row = lax.broadcasted_iota(jnp.int32, (N, Nk), 0)
        col = lax.broadcasted_iota(jnp.int32, (N, Nk), 1)
        neg = jnp.where((row < nz) & (col >= z_kv), -1e30, 0.0).astype(jnp.float32)
    else:
        neg = None

    for h in range(num_heads):                 # static unroll; nh is small
        lo = h * dh
        qh = q[:, lo:lo + dh]
        kh = kv[:, lo:lo + dh]
        vh = kv[:, C + lo:C + lo + dh]
        # contract on the shared head dim -- no materialized k transpose
        s = lax.dot_general(qh, kh, (((1,), (1,)), ((), ())),
                            preferred_element_type=jnp.float32)   # (N, Nk) f32
        if neg is not None:
            s = s + neg
        m = jnp.max(s, axis=-1, keepdims=True)
        p = jnp.exp(s - m)                                        # f32 softmax
        l = jnp.sum(p, axis=-1, keepdims=True)
        oh = jnp.dot(p.astype(jnp.bfloat16), vh,
                     preferred_element_type=jnp.float32)
        inv = pl.reciprocal(l, approx=approx_recip)               # divide -> EUP
        # per-head store into VMEM scratch: no lane concatenate, bounded lives
        hs_ref[:, lo:lo + dh] = (oh * inv).astype(jnp.bfloat16)

    # fused output projection: proj_w resident, single lane-dense f32 store
    y = jnp.dot(hs_ref[...], pw_ref[...], preferred_element_type=jnp.float32)
    o_ref[0] = (y + pb_ref[...]).astype(o_ref.dtype)


def attn_proj_pallas(q, kv, proj_w_bf16, proj_b, num_heads, nz, z_kv,
                     approx_recip=True):
    """q: (B, N, C) bf16, kv: (B, Nk, 2C) bf16 -> proj(attention(q, kv)) f32."""
    B, N, C = q.shape
    Nk = kv.shape[1]

    # Per-step VMEM footprint sanity check (double-buffered pipeline blocks +
    # scratch + resident weights + one f32 score tile).
    # TODO(synk): add flash-style Nq/Nk tiling with online softmax once this
    # trips (large token counts on v7x's 64 MiB VMEM).
    step_bytes = (2 * (N * C * 2 + Nk * 2 * C * 2 + N * C * 4)
                  + N * C * 2 + C * C * 2 + C * 4 + N * Nk * 4)
    assert step_bytes < 24 * 1024 * 1024, step_bytes

    cost = pl.CostEstimate(
        flops=4 * B * N * Nk * C + 2 * B * N * C * C,
        transcendentals=B * num_heads * N * Nk,
        bytes_accessed=2 * B * (N * C + Nk * 2 * C) + 4 * B * N * C
                       + 2 * C * C + 4 * C)

    return pl.pallas_call(
        partial(_attn_proj_kernel, num_heads=num_heads, nz=nz, z_kv=z_kv,
                approx_recip=approx_recip),
        out_shape=jax.ShapeDtypeStruct((B, N, C), jnp.float32),
        grid=(B,),
        in_specs=[pl.BlockSpec((1, N, C), lambda b: (b, 0, 0)),
                  pl.BlockSpec((1, Nk, 2 * C), lambda b: (b, 0, 0)),
                  pl.BlockSpec((C, C), lambda b: (0, 0)),
                  pl.BlockSpec((1, C), lambda b: (0, 0))],
        out_specs=pl.BlockSpec((1, N, C), lambda b: (b, 0, 0)),
        scratch_shapes=[pltpu.VMEM((N, C), jnp.bfloat16)],
        compiler_params=pltpu.CompilerParams(dimension_semantics=("parallel",)),
        cost_estimate=cost,
    )(q, kv, proj_w_bf16, proj_b)


# ------------------------------- module forward -------------------------------


def extract_patches(x_bhwc, p):
    """Non-overlapping p x p patches.  Patch vectors ordered [c, ph, pw] so the
    matmul weight matches a flattened PyTorch Conv2d weight (O, C, ph, pw)."""
    B, H, W, C = x_bhwc.shape
    Hp, Wp = H // p, W // p
    x = x_bhwc.reshape(B, Hp, p, Wp, p, C)
    x = jnp.transpose(x, (0, 1, 3, 5, 2, 4))
    return x.reshape(B, Hp * Wp, C * p * p), Hp, Wp


def prepare_params(raw, num_heads, qk_scale=None):
    """One-time parameter prep: bf16 weight casts hoisted out of the forward
    path and the softmax scale folded into q_w (in f32, before the cast)."""
    C = raw["q_w"].shape[0]
    dh = C // num_heads
    scale = qk_scale if qk_scale is not None else dh ** (-0.5)
    q_w_scaled = raw["q_w"] * scale
    return dict(
        q_w=q_w_scaled.astype(jnp.bfloat16),
        kv_w=raw["kv_w"].astype(jnp.bfloat16),
        qkv_w=jnp.concatenate([q_w_scaled, raw["kv_w"]], axis=1).astype(jnp.bfloat16),
        proj_w=raw["proj_w"].astype(jnp.bfloat16),
        proj_b=raw["proj_b"].reshape(1, -1).astype(jnp.float32),
        sr_w=raw["sr_w"].astype(jnp.bfloat16),
        sr_b=raw["sr_b"].reshape(1, -1).astype(jnp.float32),
        norm_w=raw["norm_w"].reshape(1, -1).astype(jnp.float32),
        norm_b=raw["norm_b"].reshape(1, -1).astype(jnp.float32),
    )


def attention_forward(x, H_x, W_x, H_z, W_z, prepped, num_heads, sr_ratio):
    """os_pcpvt Attention forward.  x: (B, N, C) f32, z (template) tokens
    first, N = H_z*W_z + H_x*W_x.  attn_drop / proj_drop are identity."""
    B, N, C = x.shape
    Nz, Nx = H_z * W_z, H_x * W_x
    assert N == Nz + Nx
    x2d = x.reshape(B * N, C)

    if sr_ratio > 1:
        # q projection (qkv_bias=False); heads live in channel slices of q.
        q = q_proj_pallas(x2d, prepped["q_w"])
        # spatial-reduction Conv2d (kernel == stride) == patch extract + matmul
        # TODO(synk): fold this 6-D patch transpose into the sr kernel's reads.
        parts, z_kv = [], 0
        if Nz > 0:
            zp, Hzr, Wzr = extract_patches(
                x[:, :Nz, :].reshape(B, H_z, W_z, C), sr_ratio)
            z_kv = Hzr * Wzr
            parts.append(zp)
        xp, Hxr, Wxr = extract_patches(
            x[:, Nz:, :].reshape(B, H_x, W_x, C), sr_ratio)
        parts.append(xp)
        patches = jnp.concatenate(parts, axis=1) if len(parts) > 1 else parts[0]
        Nk = z_kv + Hxr * Wxr
        # fused sr conv -> LayerNorm -> kv projection
        kv = sr_ln_kv_pallas(patches.reshape(B * Nk, C * sr_ratio * sr_ratio),
                             prepped["sr_w"], prepped["sr_b"],
                             prepped["norm_w"], prepped["norm_b"],
                             prepped["kv_w"])
    else:
        # fused q + kv projection: x read from HBM once, one launch, wide matmul
        q, kv = qkv_fused_pallas(x2d, prepped["qkv_w"])
        Nk, z_kv = N, Nz

    q = q.reshape(B, N, C)
    kv = kv.reshape(B, Nk, 2 * C)

    # single fused attention + output-projection kernel (z/x split via masking)
    return attn_proj_pallas(q, kv, prepped["proj_w"], prepped["proj_b"],
                            num_heads, Nz, z_kv)


# --------------------------- pure-JAX f32 reference ---------------------------


def attention_reference(x, H_x, W_x, H_z, W_z, params, num_heads, sr_ratio):
    B, N, C = x.shape
    dh = C // num_heads
    scale = dh ** (-0.5)
    Nz = H_z * W_z

    def split_heads(t):
        return jnp.transpose(t.reshape(B, -1, num_heads, dh), (0, 2, 1, 3))

    q = split_heads(x @ params["q_w"])

    if sr_ratio > 1:
        def sr(tok, H, W):
            patches, _, _ = extract_patches(tok.reshape(B, H, W, C), sr_ratio)
            y = patches @ params["sr_w"] + params["sr_b"]
            mu = y.mean(-1, keepdims=True)
            var = ((y - mu) ** 2).mean(-1, keepdims=True)
            return ((y - mu) / jnp.sqrt(var + 1e-5)) * params["norm_w"] + params["norm_b"]
        z_ = sr(x[:, :Nz, :], H_z, W_z)
        x_ = sr(x[:, Nz:, :], H_x, W_x)
        z_qsize = z_.shape[1]
        kv_in = jnp.concatenate([z_, x_], axis=1)
    else:
        kv_in = x
        z_qsize = Nz

    kv = kv_in @ params["kv_w"]
    Nk = kv.shape[1]
    kv = jnp.transpose(kv.reshape(B, Nk, 2, num_heads, dh), (2, 0, 3, 1, 4))
    k, v = kv[0], kv[1]

    def attn(qq, kk, vv):
        s = jnp.einsum("bhqd,bhkd->bhqk", qq, kk) * scale
        p = jax.nn.softmax(s, axis=-1)
        o = jnp.einsum("bhqk,bhkd->bhqd", p, vv)
        return jnp.transpose(o, (0, 2, 1, 3)).reshape(B, -1, C)

    az = attn(q[:, :, :Nz], k[:, :, :z_qsize], v[:, :, :z_qsize])
    ax = attn(q[:, :, Nz:], k, v)
    o = jnp.concatenate([az, ax], axis=1)
    return o @ params["proj_w"] + params["proj_b"]


# ------------------------------------ main ------------------------------------

if __name__ == "__main__":
    B, C, num_heads = 2, 32, 2
    H_x = W_x = 8          # search-region tokens: 64
    H_z = W_z = 4          # template tokens:      16
    N = H_x * W_x + H_z * W_z
    sr_conv = 2            # sr conv built for sr_ratio=2

    key = jax.random.PRNGKey(0)
    kx, kq, kkv, kp, kpb, ksr, ksb = jax.random.split(key, 7)
    std = 0.05
    params = dict(
        q_w=std * jax.random.normal(kq, (C, C), jnp.float32),
        kv_w=std * jax.random.normal(kkv, (C, 2 * C), jnp.float32),
        proj_w=std * jax.random.normal(kp, (C, C), jnp.float32),
        proj_b=std * jax.random.normal(kpb, (C,), jnp.float32),
        sr_w=std * jax.random.normal(ksr, (C * sr_conv * sr_conv, C), jnp.float32),
        sr_b=std * jax.random.normal(ksb, (C,), jnp.float32),
        norm_w=jnp.ones((C,), jnp.float32),
        norm_b=jnp.zeros((C,), jnp.float32),
    )
    x = jax.random.normal(kx, (B, N, C), jnp.float32)

    prepped = prepare_params(params, num_heads)   # one-time bf16 cast + scale fold

    for sr_ratio in (2, 1):            # exercise both the sr and identity paths
        out = attention_forward(x, H_x, W_x, H_z, W_z, prepped, num_heads, sr_ratio)
        out = jax.block_until_ready(out)
        assert out.shape == (B, N, C), out.shape
        assert bool(jnp.all(jnp.isfinite(out)))
        ref = attention_reference(x, H_x, W_x, H_z, W_z, params, num_heads, sr_ratio)
        err = float(jnp.max(jnp.abs(out - ref)) / (jnp.max(jnp.abs(ref)) + 1e-6))
        # bf16 MXU operands with f32 accumulation -> small relative error vs f32
        assert err < 0.1, f"sr_ratio={sr_ratio}: relative max error {err}"

    print("KERNEL_OK")
</pallas_src>

<mosaic_0001>
module attributes {stable_mosaic.version = 11 : i64} {
  func.func @_q_proj_kernel(%arg0: i32, %arg1: memref<160x32xf32, #tpu.memory_space<vmem>>, %arg2: memref<32x32xbf16, #tpu.memory_space<vmem>>, %arg3: memref<160x32xbf16, #tpu.memory_space<vmem>>) attributes {dimension_semantics = [#tpu.dimension_semantics<parallel>], iteration_bounds = array<i64: 1>, scalar_prefetch = 0 : i64, scratch_operands = 0 : i64, tpu.core_type = #tpu.core_type<tc>, window_params = [{transform_indices = @transform_0, window_bounds = array<i64: 160, 32>}, {pipeline_mode = #tpu.pipeline_mode<synchronous>, transform_indices = @transform_1, window_bounds = array<i64: 32, 32>}, {transform_indices = @transform_2, window_bounds = array<i64: 160, 32>}]} {
    %c0 = arith.constant 0 : index
    %c0_0 = arith.constant 0 : index
    %0 = vector.load %arg1[%c0, %c0_0] : memref<160x32xf32, #tpu.memory_space<vmem>>, vector<160x32xf32>
    %1 = arith.truncf %0 : vector<160x32xf32> to vector<160x32xbf16>
    %c0_1 = arith.constant 0 : index
    %c0_2 = arith.constant 0 : index
    %2 = vector.load %arg2[%c0_1, %c0_2] : memref<32x32xbf16, #tpu.memory_space<vmem>>, vector<32x32xbf16>
    %cst = arith.constant dense<0.000000e+00> : vector<160x32xf32>
    %3 = tpu.matmul %1, %2, %cst {dimension_numbers = #tpu.dot_dimension_numbers<[1], [0], [0], [1], [0, 0, 1, 1], [], []>} : vector<160x32xbf16>, vector<32x32xbf16>, vector<160x32xf32> -> vector<160x32xf32>
    %4 = arith.truncf %3 : vector<160x32xf32> to vector<160x32xbf16>
    %c0_3 = arith.constant 0 : index
    %c0_4 = arith.constant 0 : index
    %5 = vector.load %arg3[%c0_3, %c0_4] : memref<160x32xbf16, #tpu.memory_space<vmem>>, vector<160x32xbf16>
    tpu.vector_store %arg3[%c0_3, %c0_4], %4 {strides = array<i32>} : memref<160x32xbf16, #tpu.memory_space<vmem>>, vector<160x32xbf16>,
    return
  }
  func.func @transform_0(%arg0: i32) -> (i32, i32) {
    %c0_i32 = arith.constant 0 : i32
    %c0_i32_0 = arith.constant 0 : i32
    return %arg0, %c0_i32 : i32, i32
  }
  func.func @transform_1(%arg0: i32) -> (i32, i32) {
    %c0_i32 = arith.constant 0 : i32
    %c0_i32_0 = arith.constant 0 : i32
    %c0_i32_1 = arith.constant 0 : i32
    return %c0_i32, %c0_i32_0 : i32, i32
  }
  func.func @transform_2(%arg0: i32) -> (i32, i32) {
    %c0_i32 = arith.constant 0 : i32
    %c0_i32_0 = arith.constant 0 : i32
    return %arg0, %c0_i32 : i32, i32
  }
}

</mosaic_0001>

<llo_original>
// kernel: tpu_custom_call.1
$region0: #{tpu_custom_call.1}
  #allocation0 [shape = 'u32[]', space=smem, size = 0x4, offset = 0x4, fixed_abs, tag = 'smem constant byte address 0x4 - core index']
  #allocation1 [shape = 'u32[72,128]{1,0:T(1,128)}', space=vmem, size = 0x9000, scoped, tag = 'internal scratch']
  %s0 = inlined_call_operand.vmem [shape: f32[160,32], index: 0, kind: input, shape index: {}]
  %s1 = inlined_call_operand.vmem [shape: bf16[32,32], index: 1, kind: input, shape index: {}]
  %s2 = inlined_call_operand.vmem [shape: bf16[160,32], index: 2, kind: output, shape index: {}]
  %s3 = sld [smem:[#allocation0]]
  $region18: #{tpu_custom_call.1} parent=0
    _
  %s5 = ssub.s32 1, %s3
  %s6 = scalar_select 0, %s5, %s3
  // Predicated region
  $region2: #{tpu_custom_call.1} parent=0 // pred_check
    _
  $region3: #{tpu_custom_call.1} parent=0 // pred_check_branch
    %8 = sbr.rel (0) target = $region5
  $region4: #{tpu_custom_call.1} parent=0 // pred_region
    _
  $region5: #{tpu_custom_call.1} parent=0 // pred_fallthru
    _
  // Predicated region
  $region6: #{tpu_custom_call.1} parent=0 // pred_check
    _
  $region7: #{tpu_custom_call.1} parent=0 // pred_check_branch
    %10 = sbr.rel (0) target = $region9
  $region8: #{tpu_custom_call.1} parent=0 // pred_region
    _
  $region9: #{tpu_custom_call.1} parent=0 // pred_fallthru
    _
  %v12 = vld [vmem:[%s0] sm:$0xff]
  %v13 = vld [vmem:[%s0 + $0x8] sm:$0xff]
  %v14 = vld [vmem:[%s0 + $0x10] sm:$0xff]
  %v15 = vld [vmem:[%s0 + $0x18] sm:$0xff]
  %v16 = vld [vmem:[%s0 + $0x20] sm:$0xff]
  %v17 = vld [vmem:[%s0 + $0x28] sm:$0xff]
  %v18 = vld [vmem:[%s0 + $0x30] sm:$0xff]
  %v19 = vld [vmem:[%s0 + $0x38] sm:$0xff]
  %v20 = vld [vmem:[%s0 + $0x40] sm:$0xff]
  %v21 = vld [vmem:[%s0 + $0x48] sm:$0xff]
  %v22 = vld [vmem:[%s0 + $0x50] sm:$0xff]
  %v23 = vld [vmem:[%s0 + $0x58] sm:$0xff]
  %v24 = vld [vmem:[%s0 + $0x60] sm:$0xff]
  %v25 = vld [vmem:[%s0 + $0x68] sm:$0xff]
  %v26 = vld [vmem:[%s0 + $0x70] sm:$0xff]
  %v27 = vld [vmem:[%s0 + $0x78] sm:$0xff]
  %v28 = vld [vmem:[%s0 + $0x80] sm:$0xff]
  %v29 = vld [vmem:[%s0 + $0x88] sm:$0xff]
  %v30 = vld [vmem:[%s0 + $0x90] sm:$0xff]
  %v31 = vld [vmem:[%s0 + $0x98] sm:$0xff]
  %v32 = vpack.c.bf16 %v13, %v12
  %v33 = vpack.c.bf16 %v15, %v14
  %v34 = vpack.c.bf16 %v17, %v16
  %v35 = vpack.c.bf16 %v19, %v18
  %v36 = vpack.c.bf16 %v21, %v20
  %v37 = vpack.c.bf16 %v23, %v22
  %v38 = vpack.c.bf16 %v25, %v24
  %v39 = vpack.c.bf16 %v27, %v26
  %v40 = vpack.c.bf16 %v29, %v28
  %v41 = vpack.c.bf16 %v31, %v30
  %v42 = vld [vmem:[%s1] sm:$0xf]
  %v43 = vld [vmem:[%s1 + $0x4] sm:$0xf]
  %v44 = vld [vmem:[%s1 + $0x8] sm:$0xf]
  %v45 = vld [vmem:[%s1 + $0xc] sm:$0xf]
  %v50 = vunpack.c.l.b16 %v42
  %v51 = vunpack.c.l.b16 %v43
  %v52 = vunpack.c.l.b16 %v44
  %v53 = vunpack.c.l.b16 %v45
  %v54 = vpack.c.b16 %v51, %v50
  %v55 = vpack.c.b16 %v53, %v52
  %vm58 = vcmask 261120
  %v60 = vsel %vm58, %v32, 0
  %v63 = vsel %vm58, %v33, 0
  %v66 = vsel %vm58, %v34, 0
  %v69 = vsel %vm58, %v35, 0
  %v72 = vsel %vm58, %v36, 0
  %v75 = vsel %vm58, %v37, 0
  %v78 = vsel %vm58, %v38, 0
  %v81 = vsel %vm58, %v39, 0
  %v84 = vsel %vm58, %v40, 0
  %v87 = vsel %vm58, %v41, 0
  %89 = vmatpush.bf16.msra.mxu0 0
  %90 = vmatpush.bf16.msra.mxu0 0
  %91 = vmatpush.bf16.msra.mxu0 0
  %92 = vmatpush.bf16.msra.mxu0 0
  %93 = vmatpush.bf16.msra.mxu0 0
  %94 = vmatpush.bf16.msra.mxu0 0
  %95 = vmatpush.bf16.msra.mxu0 %v55
  %96 = vmatpush.bf16.msra.mxu0 %v54
  %97 = vmatmul.bf16.gmra.mxu0 %v60
  %v98 = vpop.f32.mrf.mxu0
  %v99 = vadd.f32 0.0, %v98
  %v100 = vpop.f32.mrf.mxu0
  %v101 = vadd.f32 0.0, %v100
  %102 = vmatmul.bf16.gmra.mxu0 %v63
  %v103 = vpop.f32.mrf.mxu0
  %v104 = vadd.f32 0.0, %v103
  %v105 = vpop.f32.mrf.mxu0
  %v106 = vadd.f32 0.0, %v105
  %107 = vmatmul.bf16.gmra.mxu0 %v66
  %v108 = vpop.f32.mrf.mxu0
  %v109 = vadd.f32 0.0, %v108
  %v110 = vpop.f32.mrf.mxu0
  %v111 = vadd.f32 0.0, %v110
  %112 = vmatmul.bf16.gmra.mxu0 %v69
  %v113 = vpop.f32.mrf.mxu0
  %v114 = vadd.f32 0.0, %v113
  %v115 = vpop.f32.mrf.mxu0
  %v116 = vadd.f32 0.0, %v115
  %117 = vmatmul.bf16.gmra.mxu0 %v72
  %v118 = vpop.f32.mrf.mxu0
  %v119 = vadd.f32 0.0, %v118
  %v120 = vpop.f32.mrf.mxu0
  %v121 = vadd.f32 0.0, %v120
  %122 = vmatmul.bf16.gmra.mxu0 %v75
  %v123 = vpop.f32.mrf.mxu0
  %v124 = vadd.f32 0.0, %v123
  %v125 = vpop.f32.mrf.mxu0
  %v126 = vadd.f32 0.0, %v125
  %127 = vmatmul.bf16.gmra.mxu0 %v78
  %v128 = vpop.f32.mrf.mxu0
  %v129 = vadd.f32 0.0, %v128
  %v130 = vpop.f32.mrf.mxu0
  %v131 = vadd.f32 0.0, %v130
  %132 = vmatmul.bf16.gmra.mxu0 %v81
  %v133 = vpop.f32.mrf.mxu0
  %v134 = vadd.f32 0.0, %v133
  %v135 = vpop.f32.mrf.mxu0
  %v136 = vadd.f32 0.0, %v135
  %137 = vmatmul.bf16.gmra.mxu0 %v84
  %v138 = vpop.f32.mrf.mxu0
  %v139 = vadd.f32 0.0, %v138
  %v140 = vpop.f32.mrf.mxu0
  %v141 = vadd.f32 0.0, %v140
  %142 = vmatmul.bf16.gmra.mxu0 %v87
  %v143 = vpop.f32.mrf.mxu0
  %v144 = vadd.f32 0.0, %v143
  %v145 = vpop.f32.mrf.mxu0
  %v146 = vadd.f32 0.0, %v145
  %147 = vdwg.mxu0
  %v148 = vpack.c.bf16 %v99, %v99
  %v149 = vpack.c.bf16 %v101, %v101
  %v150 = vpack.c.bf16 %v104, %v104
  %v151 = vpack.c.bf16 %v106, %v106
  %v152 = vpack.c.bf16 %v109, %v109
  %v153 = vpack.c.bf16 %v111, %v111
  %v154 = vpack.c.bf16 %v114, %v114
  %v155 = vpack.c.bf16 %v116, %v116
  %v156 = vpack.c.bf16 %v119, %v119
  %v157 = vpack.c.bf16 %v121, %v121
  %v158 = vpack.c.bf16 %v124, %v124
  %v159 = vpack.c.bf16 %v126, %v126
  %v160 = vpack.c.bf16 %v129, %v129
  %v161 = vpack.c.bf16 %v131, %v131
  %v162 = vpack.c.bf16 %v134, %v134
  %v163 = vpack.c.bf16 %v136, %v136
  %v164 = vpack.c.bf16 %v139, %v139
  %v165 = vpack.c.bf16 %v141, %v141
  %v166 = vpack.c.bf16 %v144, %v144
  %v167 = vpack.c.bf16 %v146, %v146
  %vm168 = vcmask 257024
  %169 = vst.msk [vmem:[%s2] sm:$0xf] %vm168, %v148
  %170 = vst.msk [vmem:[%s2 + $0x4] sm:$0xf] %vm168, %v149
  %171 = vst.msk [vmem:[%s2 + $0x8] sm:$0xf] %vm168, %v150
  %172 = vst.msk [vmem:[%s2 + $0xc] sm:$0xf] %vm168, %v151
  %173 = vst.msk [vmem:[%s2 + $0x10] sm:$0xf] %vm168, %v152
  %174 = vst.msk [vmem:[%s2 + $0x14] sm:$0xf] %vm168, %v153
  %175 = vst.msk [vmem:[%s2 + $0x18] sm:$0xf] %vm168, %v154
  %176 = vst.msk [vmem:[%s2 + $0x1c] sm:$0xf] %vm168, %v155
  %177 = vst.msk [vmem:[%s2 + $0x20] sm:$0xf] %vm168, %v156
  %178 = vst.msk [vmem:[%s2 + $0x24] sm:$0xf] %vm168, %v157
  %179 = vst.msk [vmem:[%s2 + $0x28] sm:$0xf] %vm168, %v158
  %180 = vst.msk [vmem:[%s2 + $0x2c] sm:$0xf] %vm168, %v159
  %181 = vst.msk [vmem:[%s2 + $0x30] sm:$0xf] %vm168, %v160
  %182 = vst.msk [vmem:[%s2 + $0x34] sm:$0xf] %vm168, %v161
  %183 = vst.msk [vmem:[%s2 + $0x38] sm:$0xf] %vm168, %v162
  %184 = vst.msk [vmem:[%s2 + $0x3c] sm:$0xf] %vm168, %v163
  %185 = vst.msk [vmem:[%s2 + $0x40] sm:$0xf] %vm168, %v164
  %186 = vst.msk [vmem:[%s2 + $0x44] sm:$0xf] %vm168, %v165
  %187 = vst.msk [vmem:[%s2 + $0x48] sm:$0xf] %vm168, %v166
  %188 = vst.msk [vmem:[%s2 + $0x4c] sm:$0xf] %vm168, %v167
  // Predicated region
  $region10: #{tpu_custom_call.1} parent=0 // pred_check
    _
  $region11: #{tpu_custom_call.1} parent=0 // pred_check_branch
    %190 = sbr.rel (0) target = $region13
  $region12: #{tpu_custom_call.1} parent=0 // pred_region
    _
  $region13: #{tpu_custom_call.1} parent=0 // pred_fallthru
    _
  // Predicated region
  $region14: #{tpu_custom_call.1} parent=0 // pred_check
    _
  $region15: #{tpu_custom_call.1} parent=0 // pred_check_branch
    %192 = sbr.rel (0) target = $region17
  $region16: #{tpu_custom_call.1} parent=0 // pred_region
    _
  $region17: #{tpu_custom_call.1} parent=0 // pred_fallthru
    _

</llo_original>
